<compile_context>
chip_gen: v6e
topology: v6e:2x2x1
jax: 0.10.0
libtpu: 0.0.40
codegen_flags: <defaults>
</compile_context>

<pallas_src>
import functools
import math

import jax
import jax.numpy as jnp
from jax.experimental import pallas as pl
from jax.experimental.pallas import tpu as pltpu

EPS = 1e-5
EPS2 = EPS * EPS
INV_SQRT2 = float(2.0 ** -0.5)


def _round_up(x, m):
    return ((x + m - 1) // m) * m


def _cdiv(a, b):
    return -(-a // b)


# --------------------------------------------------------------------------- #
# Kernel: per-row stats -> one f32 MXU matmul on raw x -> folded RevIN.        #
# --------------------------------------------------------------------------- #
def swift_kernel(x_ref, rowc_ref, w_ref, cwb_ref, o_ref, *, inv_n):
    x = x_ref[...]                       # (m_blk, L_pad) f32; rows = (b, c) series
    rowc = rowc_ref[...]                 # (m_blk, 3): [aw/(aw+e2), 1/(aw+e2), ab]
    alpha = rowc[:, 0:1]
    inv_awe = rowc[:, 1:2]
    ab = rowc[:, 2:3]

    # RevIN statistics.  Single-pass variance (E[x^2] - mean^2): the zero
    # K-padding columns contribute nothing; inv_n = 1/true_seq_len.
    mean = jnp.sum(x, axis=-1, keepdims=True) * inv_n
    ex2 = jnp.sum(x * x, axis=-1, keepdims=True) * inv_n
    var = jnp.maximum(ex2 - mean * mean, 0.0)
    std = jnp.sqrt(var + EPS)

    d = std * inv_awe                    # stdev / (aw + eps^2), exact reciprocal
    r = d * ab

    # The whole linear network (de-interleave + haar DWT + Conv1d+residual +
    # shared Linear + inverse DWT + re-interleave) is one fused matmul; RevIN
    # norm/denorm are folded into the rank-1 corrections below
    # (cw = column sums of the fused weight, b = fused bias).
    xw = jnp.dot(x, w_ref[...], preferred_element_type=jnp.float32)

    cw = cwb_ref[0:1, :]
    b = cwb_ref[1:2, :]
    o_ref[...] = alpha * xw + (r - alpha * mean) * cw + d * b + (mean - r)


# --------------------------------------------------------------------------- #
# Wrapper-side fusion of all batch-invariant linear stages (hoisted, run once). #
# --------------------------------------------------------------------------- #
def _build_fused_weight(conv_w, lin_w, lin_b, seq_len, pred_len):
    """Fold de-interleave + haar DWT + Conv1d(2,2,k)+residual + shared Linear +
    inverse haar DWT + re-interleave into one (seq_len, pred_len) matrix + bias."""
    Lh, Lp = seq_len // 2, pred_len // 2
    k = conv_w.shape[-1]
    pad = (k - 1) // 2

    # D: interleaved input row (L,) -> [yl | yh] (2*Lh,)
    m = jnp.arange(Lh)
    D = jnp.zeros((seq_len, 2 * Lh), jnp.float32)
    D = D.at[2 * m, m].set(INV_SQRT2)
    D = D.at[2 * m + 1, m].set(INV_SQRT2)
    D = D.at[2 * m, Lh + m].set(INV_SQRT2)
    D = D.at[2 * m + 1, Lh + m].set(-INV_SQRT2)

    # I + A: Conv1d(2, 2, k, padding=(k-1)//2, bias=False) + residual, as a row map.
    mm = jnp.arange(Lh)[:, None]
    nn = jnp.arange(Lh)[None, :]
    t = mm - nn + pad
    inband = (t >= 0) & (t < k)
    tc = jnp.clip(t, 0, k - 1)
    A = jnp.zeros((2 * Lh, 2 * Lh), jnp.float32)
    for o in range(2):
        for i in range(2):
            band = jnp.where(inband, conv_w[o, i, tc], 0.0)
            A = A.at[i * Lh:(i + 1) * Lh, o * Lh:(o + 1) * Lh].set(band)
    Mmat = jnp.eye(2 * Lh, dtype=jnp.float32) + A

    # Shared Linear upsampler on both coefficient rows: blockdiag(lin_w.T, lin_w.T).
    Wl = jnp.zeros((2 * Lh, 2 * Lp), jnp.float32)
    Wl = Wl.at[:Lh, :Lp].set(lin_w.T)
    Wl = Wl.at[Lh:, Lp:].set(lin_w.T)
    bl = jnp.concatenate([lin_b, lin_b])                       # (2*Lp,)

    # H: [z_l | z_h] (2*Lp,) -> interleaved prediction (pred_len,) (inverse haar DWT).
    p = jnp.arange(Lp)
    H = jnp.zeros((2 * Lp, pred_len), jnp.float32)
    H = H.at[p, 2 * p].set(INV_SQRT2)
    H = H.at[Lp + p, 2 * p].set(INV_SQRT2)
    H = H.at[p, 2 * p + 1].set(INV_SQRT2)
    H = H.at[Lp + p, 2 * p + 1].set(-INV_SQRT2)

    W = D @ Mmat @ Wl @ H                                      # (seq_len, pred_len)
    b = bl @ H                                                 # (pred_len,)
    return W, b


def prepare_swift_constants(params, seq_len, pred_len):
    """Batch-invariant constants: call once per parameter set and reuse."""
    conv_w = params["conv_w"].astype(jnp.float32)
    lin_w = params["lin_w"].astype(jnp.float32)
    lin_b = params["lin_b"].astype(jnp.float32)
    aw = params["affine_w"].astype(jnp.float32)
    ab = params["affine_b"].astype(jnp.float32)

    W, b = _build_fused_weight(conv_w, lin_w, lin_b, seq_len, pred_len)

    L_pad = _round_up(seq_len, 128)          # aligned MXU K / lane-dense loads
    Np = _round_up(pred_len, 128)            # lane-dense (unmasked) output stores
    W_pad = jnp.zeros((L_pad, Np), jnp.float32).at[:seq_len, :pred_len].set(W)
    cw = jnp.sum(W, axis=0)                  # column sums of the true fused weight
    cwb = jnp.zeros((2, Np), jnp.float32)
    cwb = cwb.at[0, :pred_len].set(cw)
    cwb = cwb.at[1, :pred_len].set(b)

    awe = aw + EPS2
    rowc = jnp.stack([aw / awe, 1.0 / awe, ab], axis=1)        # (C, 3), exact reciprocals

    return {"W": W_pad, "cwb": cwb, "rowc": rowc,
            "seq_len": seq_len, "pred_len": pred_len, "L_pad": L_pad, "Np": Np}


def _choose_m_block(M, L_pad, Np, target=512, vmem_budget=12 * 1024 * 1024):
    """Row-block size: scale toward `target` rows (amortize per-step overhead),
    keep >= 2 blocks when possible (v7x megacore), waste <= 7 pad rows, and bound
    the double-buffered footprint by `vmem_budget` (under v5e's 16 MiB default)."""
    M8 = _round_up(max(M, 1), 8)
    const_bytes = 4 * (L_pad * Np + 2 * Np)            # single-buffered W + [cw; b]
    row_bytes = 4 * (3 * L_pad + 3 * Np + 16)          # 2x x-buf + temp, 2x out-buf + temp
    cap = max(8, ((vmem_budget - const_bytes) // max(row_bytes, 1)) // 8 * 8)
    tgt = max(8, min(target, cap))
    n_blocks = max(_cdiv(M8, tgt), 2 if M8 >= 16 else 1)
    m_blk = min(_round_up(_cdiv(M8, n_blocks), 8), tgt)
    grid = _cdiv(M8, m_blk)
    est_vmem = const_bytes + m_blk * row_bytes
    return m_blk, grid, est_vmem


def swift_linear_forward(x, consts):
    """x: (B, seq_len, enc_in) float32 -> (B, pred_len, enc_in) float32."""
    B, L, C = x.shape
    assert L == consts["seq_len"]
    pred_len, L_pad, Np = consts["pred_len"], consts["L_pad"], consts["Np"]

    # Fold batch & channels into the M / sublane axis: (B*C, L) row slab.
    xr = jnp.transpose(x, (0, 2, 1)).reshape(B * C, L).astype(jnp.float32)
    rowc = jnp.tile(consts["rowc"], (B, 1))                     # row order b*C + c

    M = B * C
    m_blk, grid, est_vmem = _choose_m_block(M, L_pad, Np)
    M_pad = m_blk * grid

    xr = jnp.pad(xr, ((0, M_pad - M), (0, L_pad - L)))
    rowc = jnp.pad(rowc, ((0, M_pad - M), (0, 0)))

    cp_kwargs = dict(dimension_semantics=("parallel",))
    if est_vmem > 14 * 1024 * 1024:                             # above default scoped VMEM
        cp_kwargs["vmem_limit_bytes"] = int(min(est_vmem * 5 // 4, 56 * 1024 * 1024))
    compiler_params = pltpu.CompilerParams(**cp_kwargs)

    kernel = functools.partial(swift_kernel, inv_n=1.0 / float(L))

    def run(single_buffer_consts):
        if single_buffer_consts:
            w_spec = pl.BlockSpec((L_pad, Np), lambda i: (0, 0),
                                  pipeline_mode=pl.Buffered(1))
            c_spec = pl.BlockSpec((2, Np), lambda i: (0, 0),
                                  pipeline_mode=pl.Buffered(1))
        else:
            w_spec = pl.BlockSpec((L_pad, Np), lambda i: (0, 0))
            c_spec = pl.BlockSpec((2, Np), lambda i: (0, 0))
        return pl.pallas_call(
            kernel,
            out_shape=jax.ShapeDtypeStruct((M_pad, Np), jnp.float32),
            grid=(grid,),
            in_specs=[
                pl.BlockSpec((m_blk, L_pad), lambda i: (i, 0)),   # input rows
                pl.BlockSpec((m_blk, 3), lambda i: (i, 0)),       # per-row RevIN consts
                w_spec,                                           # fused weight (constant)
                c_spec,                                           # [colsum(W); bias]
            ],
            out_specs=pl.BlockSpec((m_blk, Np), lambda i: (i, 0)),
            compiler_params=compiler_params,
        )(xr, rowc, consts["W"], consts["cwb"])

    try:
        out = run(True)       # constants single-buffered (VMEM headroom, esp. v7x)
    except Exception:
        out = run(False)      # fallback if pipeline_mode=Buffered(1) is unsupported

    out = out[:M, :pred_len].reshape(B, C, pred_len)
    return jnp.transpose(out, (0, 2, 1))


# --------------------------------------------------------------------------- #
# Pure-JAX reference (mirrors the PyTorch forward) for verification.           #
# --------------------------------------------------------------------------- #
def reference_forward(x, params, conv_kernel):
    B, L, C = x.shape
    mean = jnp.mean(x, axis=1, keepdims=True)
    var = jnp.mean((x - mean) ** 2, axis=1, keepdims=True)
    stdev = jnp.sqrt(var + EPS)
    xn = (x - mean) / stdev * params["affine_w"] + params["affine_b"]
    xt = jnp.transpose(xn, (0, 2, 1)).reshape(B, C, L // 2, 2)
    yl = (xt[..., 0] + xt[..., 1]) * INV_SQRT2
    yh = (xt[..., 0] - xt[..., 1]) * INV_SQRT2
    y = jnp.stack([yl, yh], axis=-2)                           # (B, C, 2, Lh)
    Lh = L // 2
    pad = (conv_kernel - 1) // 2
    conv_out = jax.lax.conv_general_dilated(
        y.reshape(B * C, 2, Lh), params["conv_w"], window_strides=(1,),
        padding=[(pad, pad)], dimension_numbers=("NCH", "OIH", "NCH"))
    y = conv_out.reshape(B, C, 2, Lh) + y
    z = jnp.einsum("bcsl,pl->bcsp", y, params["lin_w"]) + params["lin_b"]
    zl, zh = z[:, :, 0, :], z[:, :, 1, :]
    out_e = (zl + zh) * INV_SQRT2
    out_o = (zl - zh) * INV_SQRT2
    out = jnp.stack([out_e, out_o], axis=-1).reshape(B, C, -1)
    out = jnp.transpose(out, (0, 2, 1))
    out = (out - params["affine_b"]) / (params["affine_w"] + EPS2)
    return out * stdev + mean


if __name__ == "__main__":
    cases = [
        # (batch, seq_len, pred_len, enc_in, conv_kernel)
        (3, 16, 8, 5, 3),      # tiny, exercises M/K/N padding and grid=2
        (4, 96, 24, 6, 5),     # typical (unaligned) forecasting shape, small
    ]
    key = jax.random.PRNGKey(0)
    for (batch, seq_len, pred_len, enc_in, conv_kernel) in cases:
        key, k1, k2, k3, k4, k5, k6 = jax.random.split(key, 7)
        params = {
            "conv_w": 0.3 * jax.random.normal(k1, (2, 2, conv_kernel), jnp.float32),
            "lin_w": jax.random.normal(k2, (pred_len // 2, seq_len // 2), jnp.float32)
                     / math.sqrt(seq_len // 2),
            "lin_b": 0.01 * jax.random.normal(k3, (pred_len // 2,), jnp.float32),
            "affine_w": 1.0 + 0.1 * jax.random.normal(k4, (enc_in,), jnp.float32),
            "affine_b": 0.05 * jax.random.normal(k5, (enc_in,), jnp.float32),
        }
        x = jax.random.normal(k6, (batch, seq_len, enc_in), jnp.float32)

        consts = prepare_swift_constants(params, seq_len, pred_len)  # hoisted: once per params
        out = jax.block_until_ready(swift_linear_forward(x, consts))
        ref = jax.block_until_ready(reference_forward(x, params, conv_kernel))

        assert out.shape == (batch, pred_len, enc_in), out.shape
        assert bool(jnp.all(jnp.isfinite(out)))
        err = float(jnp.max(jnp.abs(out - ref)))
        assert jnp.allclose(out, ref, rtol=2e-3, atol=2e-3), err
    print("KERNEL_OK")
</pallas_src>

<mosaic_0001>
module attributes {stable_mosaic.version = 11 : i64} {
  func.func @swift_kernel(%arg0: i32, %arg1: memref<8x128xf32, #tpu.memory_space<vmem>>, %arg2: memref<8x3xf32, #tpu.memory_space<vmem>>, %arg3: memref<128x128xf32, #tpu.memory_space<vmem>>, %arg4: memref<2x128xf32, #tpu.memory_space<vmem>>, %arg5: memref<8x128xf32, #tpu.memory_space<vmem>>) attributes {dimension_semantics = [#tpu.dimension_semantics<parallel>], iteration_bounds = array<i64: 2>, scalar_prefetch = 0 : i64, scratch_operands = 0 : i64, tpu.core_type = #tpu.core_type<tc>, window_params = [{transform_indices = @transform_0, window_bounds = array<i64: 8, 128>}, {transform_indices = @transform_1, window_bounds = array<i64: 8, 3>}, {pipeline_mode = #tpu.pipeline_mode<synchronous>, transform_indices = @transform_2, window_bounds = array<i64: 128, 128>}, {pipeline_mode = #tpu.pipeline_mode<synchronous>, transform_indices = @transform_3, window_bounds = array<i64: 2, 128>}, {transform_indices = @transform_4, window_bounds = array<i64: 8, 128>}]} {
    %c0 = arith.constant 0 : index
    %c0_0 = arith.constant 0 : index
    %0 = vector.load %arg1[%c0, %c0_0] : memref<8x128xf32, #tpu.memory_space<vmem>>, vector<8x128xf32>
    %c0_1 = arith.constant 0 : index
    %c0_2 = arith.constant 0 : index
    %1 = vector.load %arg2[%c0_1, %c0_2] : memref<8x3xf32, #tpu.memory_space<vmem>>, vector<8x3xf32>
    %2 = vector.extract_strided_slice %1 {offsets = [0, 0], sizes = [8, 1], strides = [1, 1]} : vector<8x3xf32> to vector<8x1xf32>
    %3 = vector.extract_strided_slice %1 {offsets = [0, 1], sizes = [8, 1], strides = [1, 1]} : vector<8x3xf32> to vector<8x1xf32>
    %4 = vector.extract_strided_slice %1 {offsets = [0, 2], sizes = [8, 1], strides = [1, 1]} : vector<8x3xf32> to vector<8x1xf32>
    %cst = arith.constant dense<0.000000e+00> : vector<8xf32>
    %5 = vector.multi_reduction <add>, %0, %cst [1] : vector<8x128xf32> to vector<8xf32>
    %6 = vector.shape_cast %5 : vector<8xf32> to vector<8x1xf32>
    %cst_3 = arith.constant 6.250000e-02 : f32
    %7 = vector.broadcast %cst_3 : f32 to vector<8x1xf32>
    %8 = arith.mulf %6, %7 : vector<8x1xf32>
    %9 = arith.mulf %0, %0 : vector<8x128xf32>
    %cst_4 = arith.constant dense<0.000000e+00> : vector<8xf32>
    %10 = vector.multi_reduction <add>, %9, %cst_4 [1] : vector<8x128xf32> to vector<8xf32>
    %11 = vector.shape_cast %10 : vector<8xf32> to vector<8x1xf32>
    %cst_5 = arith.constant 6.250000e-02 : f32
    %12 = vector.broadcast %cst_5 : f32 to vector<8x1xf32>
    %13 = arith.mulf %11, %12 : vector<8x1xf32>
    %14 = arith.mulf %8, %8 : vector<8x1xf32>
    %15 = arith.subf %13, %14 : vector<8x1xf32>
    %cst_6 = arith.constant 0.000000e+00 : f32
    %16 = vector.broadcast %cst_6 : f32 to vector<8x1xf32>
    %17 = arith.maximumf %15, %16 : vector<8x1xf32>
    %cst_7 = arith.constant 9.99999974E-6 : f32
    %18 = vector.broadcast %cst_7 : f32 to vector<8x1xf32>
    %19 = arith.addf %17, %18 : vector<8x1xf32>
    %20 = math.sqrt %19 : vector<8x1xf32>
    %21 = arith.mulf %20, %3 : vector<8x1xf32>
    %22 = arith.mulf %21, %4 : vector<8x1xf32>
    %c0_8 = arith.constant 0 : index
    %c0_9 = arith.constant 0 : index
    %23 = vector.load %arg3[%c0_8, %c0_9] : memref<128x128xf32, #tpu.memory_space<vmem>>, vector<128x128xf32>
    %cst_10 = arith.constant dense<0.000000e+00> : vector<8x128xf32>
    %24 = tpu.matmul %0, %23, %cst_10 {dimension_numbers = #tpu.dot_dimension_numbers<[1], [0], [0], [1], [0, 0, 1, 1], [], []>} : vector<8x128xf32>, vector<128x128xf32>, vector<8x128xf32> -> vector<8x128xf32>
    %c0_11 = arith.constant 0 : index
    %c0_12 = arith.constant 0 : index
    %25 = vector.load %arg4[%c0_11, %c0_12] : memref<2x128xf32, #tpu.memory_space<vmem>>, vector<1x128xf32>
    %c1 = arith.constant 1 : index
    %c0_13 = arith.constant 0 : index
    %26 = vector.load %arg4[%c1, %c0_13] : memref<2x128xf32, #tpu.memory_space<vmem>>, vector<1x128xf32>
    %27 = vector.broadcast %2 : vector<8x1xf32> to vector<8x128xf32>
    %28 = arith.mulf %27, %24 : vector<8x128xf32>
    %29 = arith.mulf %2, %8 : vector<8x1xf32>
    %30 = arith.subf %22, %29 : vector<8x1xf32>
    %31 = vector.broadcast %30 : vector<8x1xf32> to vector<8x128xf32>
    %32 = vector.broadcast %25 : vector<1x128xf32> to vector<8x128xf32>
    %33 = arith.mulf %31, %32 : vector<8x128xf32>
    %34 = arith.addf %28, %33 : vector<8x128xf32>
    %35 = vector.broadcast %21 : vector<8x1xf32> to vector<8x128xf32>
    %36 = vector.broadcast %26 : vector<1x128xf32> to vector<8x128xf32>
    %37 = arith.mulf %35, %36 : vector<8x128xf32>
    %38 = arith.addf %34, %37 : vector<8x128xf32>
    %39 = arith.subf %8, %22 : vector<8x1xf32>
    %40 = vector.broadcast %39 : vector<8x1xf32> to vector<8x128xf32>
    %41 = arith.addf %38, %40 : vector<8x128xf32>
    %c0_14 = arith.constant 0 : index
    %c0_15 = arith.constant 0 : index
    %42 = vector.load %arg5[%c0_14, %c0_15] : memref<8x128xf32, #tpu.memory_space<vmem>>, vector<8x128xf32>
    tpu.vector_store %arg5[%c0_14, %c0_15], %41 {strides = array<i32>} : memref<8x128xf32, #tpu.memory_space<vmem>>, vector<8x128xf32>,
    return
  }
  func.func @transform_0(%arg0: i32) -> (i32, i32) {
    %c0_i32 = arith.constant 0 : i32
    %c0_i32_0 = arith.constant 0 : i32
    return %arg0, %c0_i32 : i32, i32
  }
  func.func @transform_1(%arg0: i32) -> (i32, i32) {
    %c0_i32 = arith.constant 0 : i32
    %c0_i32_0 = arith.constant 0 : i32
    return %arg0, %c0_i32 : i32, i32
  }
  func.func @transform_2(%arg0: i32) -> (i32, i32) {
    %c0_i32 = arith.constant 0 : i32
    %c0_i32_0 = arith.constant 0 : i32
    %c0_i32_1 = arith.constant 0 : i32
    return %c0_i32, %c0_i32_0 : i32, i32
  }
  func.func @transform_3(%arg0: i32) -> (i32, i32) {
    %c0_i32 = arith.constant 0 : i32
    %c0_i32_0 = arith.constant 0 : i32
    %c0_i32_1 = arith.constant 0 : i32
    return %c0_i32, %c0_i32_0 : i32, i32
  }
  func.func @transform_4(%arg0: i32) -> (i32, i32) {
    %c0_i32 = arith.constant 0 : i32
    %c0_i32_0 = arith.constant 0 : i32
    return %arg0, %c0_i32 : i32, i32
  }
}

module attributes {stable_mosaic.version = 11 : i64} {
  func.func @swift_kernel(%arg0: i32, %arg1: memref<8x128xf32, #tpu.memory_space<vmem>>, %arg2: memref<8x3xf32, #tpu.memory_space<vmem>>, %arg3: memref<128x128xf32, #tpu.memory_space<vmem>>, %arg4: memref<2x128xf32, #tpu.memory_space<vmem>>, %arg5: memref<8x128xf32, #tpu.memory_space<vmem>>) attributes {dimension_semantics = [#tpu.dimension_semantics<parallel>], iteration_bounds = array<i64: 2>, scalar_prefetch = 0 : i64, scratch_operands = 0 : i64, tpu.core_type = #tpu.core_type<tc>, window_params = [{transform_indices = @transform_0, window_bounds = array<i64: 8, 128>}, {transform_indices = @transform_1, window_bounds = array<i64: 8, 3>}, {pipeline_mode = #tpu.pipeline_mode<synchronous>, transform_indices = @transform_2, window_bounds = array<i64: 128, 128>}, {pipeline_mode = #tpu.pipeline_mode<synchronous>, transform_indices = @transform_3, window_bounds = array<i64: 2, 128>}, {transform_indices = @transform_4, window_bounds = array<i64: 8, 128>}]} {
    %c0 = arith.constant 0 : index
    %c0_0 = arith.constant 0 : index
    %0 = vector.load %arg1[%c0, %c0_0] : memref<8x128xf32, #tpu.memory_space<vmem>>, vector<8x128xf32>
    %c0_1 = arith.constant 0 : index
    %c0_2 = arith.constant 0 : index
    %1 = vector.load %arg2[%c0_1, %c0_2] : memref<8x3xf32, #tpu.memory_space<vmem>>, vector<8x3xf32>
    %2 = vector.extract_strided_slice %1 {offsets = [0, 0], sizes = [8, 1], strides = [1, 1]} : vector<8x3xf32> to vector<8x1xf32>
    %3 = vector.extract_strided_slice %1 {offsets = [0, 1], sizes = [8, 1], strides = [1, 1]} : vector<8x3xf32> to vector<8x1xf32>
    %4 = vector.extract_strided_slice %1 {offsets = [0, 2], sizes = [8, 1], strides = [1, 1]} : vector<8x3xf32> to vector<8x1xf32>
    %cst = arith.constant dense<0.000000e+00> : vector<8xf32>
    %5 = vector.multi_reduction <add>, %0, %cst [1] : vector<8x128xf32> to vector<8xf32>
    %6 = vector.shape_cast %5 : vector<8xf32> to vector<8x1xf32>
    %cst_3 = arith.constant 6.250000e-02 : f32
    %7 = vector.broadcast %cst_3 : f32 to vector<8x1xf32>
    %8 = arith.mulf %6, %7 : vector<8x1xf32>
    %9 = arith.mulf %0, %0 : vector<8x128xf32>
    %cst_4 = arith.constant dense<0.000000e+00> : vector<8xf32>
    %10 = vector.multi_reduction <add>, %9, %cst_4 [1] : vector<8x128xf32> to vector<8xf32>
    %11 = vector.shape_cast %10 : vector<8xf32> to vector<8x1xf32>
    %cst_5 = arith.constant 6.250000e-02 : f32
    %12 = vector.broadcast %cst_5 : f32 to vector<8x1xf32>
    %13 = arith.mulf %11, %12 : vector<8x1xf32>
    %14 = arith.mulf %8, %8 : vector<8x1xf32>
    %15 = arith.subf %13, %14 : vector<8x1xf32>
    %cst_6 = arith.constant 0.000000e+00 : f32
    %16 = vector.broadcast %cst_6 : f32 to vector<8x1xf32>
    %17 = arith.maximumf %15, %16 : vector<8x1xf32>
    %cst_7 = arith.constant 9.99999974E-6 : f32
    %18 = vector.broadcast %cst_7 : f32 to vector<8x1xf32>
    %19 = arith.addf %17, %18 : vector<8x1xf32>
    %20 = math.sqrt %19 : vector<8x1xf32>
    %21 = arith.mulf %20, %3 : vector<8x1xf32>
    %22 = arith.mulf %21, %4 : vector<8x1xf32>
    %c0_8 = arith.constant 0 : index
    %c0_9 = arith.constant 0 : index
    %23 = vector.load %arg3[%c0_8, %c0_9] : memref<128x128xf32, #tpu.memory_space<vmem>>, vector<128x128xf32>
    %cst_10 = arith.constant dense<0.000000e+00> : vector<8x128xf32>
    %24 = tpu.matmul %0, %23, %cst_10 {dimension_numbers = #tpu.dot_dimension_numbers<[1], [0], [0], [1], [0, 0, 1, 1], [], []>} : vector<8x128xf32>, vector<128x128xf32>, vector<8x128xf32> -> vector<8x128xf32>
    %c0_11 = arith.constant 0 : index
    %c0_12 = arith.constant 0 : index
    %25 = vector.load %arg4[%c0_11, %c0_12] : memref<2x128xf32, #tpu.memory_space<vmem>>, vector<1x128xf32>
    %c1 = arith.constant 1 : index
    %c0_13 = arith.constant 0 : index
    %26 = vector.load %arg4[%c1, %c0_13] : memref<2x128xf32, #tpu.memory_space<vmem>>, vector<1x128xf32>
    %27 = vector.broadcast %2 : vector<8x1xf32> to vector<8x128xf32>
    %28 = arith.mulf %27, %24 : vector<8x128xf32>
    %29 = arith.mulf %2, %8 : vector<8x1xf32>
    %30 = arith.subf %22, %29 : vector<8x1xf32>
    %31 = vector.broadcast %30 : vector<8x1xf32> to vector<8x128xf32>
    %32 = vector.broadcast %25 : vector<1x128xf32> to vector<8x128xf32>
    %33 = arith.mulf %31, %32 : vector<8x128xf32>
    %34 = arith.addf %28, %33 : vector<8x128xf32>
    %35 = vector.broadcast %21 : vector<8x1xf32> to vector<8x128xf32>
    %36 = vector.broadcast %26 : vector<1x128xf32> to vector<8x128xf32>
    %37 = arith.mulf %35, %36 : vector<8x128xf32>
    %38 = arith.addf %34, %37 : vector<8x128xf32>
    %39 = arith.subf %8, %22 : vector<8x1xf32>
    %40 = vector.broadcast %39 : vector<8x1xf32> to vector<8x128xf32>
    %41 = arith.addf %38, %40 : vector<8x128xf32>
    %c0_14 = arith.constant 0 : index
    %c0_15 = arith.constant 0 : index
    %42 = vector.load %arg5[%c0_14, %c0_15] : memref<8x128xf32, #tpu.memory_space<vmem>>, vector<8x128xf32>
    tpu.vector_store %arg5[%c0_14, %c0_15], %41 {strides = array<i32>} : memref<8x128xf32, #tpu.memory_space<vmem>>, vector<8x128xf32>,
    return
  }
  func.func @transform_0(%arg0: i32) -> (i32, i32) {
    %c0_i32 = arith.constant 0 : i32
    %c0_i32_0 = arith.constant 0 : i32
    return %arg0, %c0_i32 : i32, i32
  }
  func.func @transform_1(%arg0: i32) -> (i32, i32) {
    %c0_i32 = arith.constant 0 : i32
    %c0_i32_0 = arith.constant 0 : i32
    return %arg0, %c0_i32 : i32, i32
  }
  func.func @transform_2(%arg0: i32) -> (i32, i32) {
    %c0_i32 = arith.constant 0 : i32
    %c0_i32_0 = arith.constant 0 : i32
    %c0_i32_1 = arith.constant 0 : i32
    return %c0_i32, %c0_i32_0 : i32, i32
  }
  func.func @transform_3(%arg0: i32) -> (i32, i32) {
    %c0_i32 = arith.constant 0 : i32
    %c0_i32_0 = arith.constant 0 : i32
    %c0_i32_1 = arith.constant 0 : i32
    return %c0_i32, %c0_i32_0 : i32, i32
  }
  func.func @transform_4(%arg0: i32) -> (i32, i32) {
    %c0_i32 = arith.constant 0 : i32
    %c0_i32_0 = arith.constant 0 : i32
    return %arg0, %c0_i32 : i32, i32
  }
}

</mosaic_0001>

<llo_original>
// kernel: tpu_custom_call.1
$region0: #{tpu_custom_call.1}
  #allocation0 [shape = 'u32[]', space=smem, size = 0x4, offset = 0x4, fixed_abs, tag = 'smem constant byte address 0x4 - core index']
  #allocation1 [shape = 'u32[144,128]{1,0:T(1,128)}', space=vmem, size = 0x12000, scoped, tag = 'internal scratch']
  %s0 = inlined_call_operand.vmem [shape: f32[16,128], index: 0, kind: input, shape index: {}]
  %s1 = inlined_call_operand.vmem [shape: f32[16,3], index: 1, kind: input, shape index: {}]
  %s2 = inlined_call_operand.hbm [shape: f32[128,128], index: 2, kind: input, shape index: {}]
  %s3 = inlined_call_operand.vmem [shape: f32[2,128], index: 3, kind: input, shape index: {}]
  %s4 = inlined_call_operand.hbm [shape: f32[16,128], index: 4, kind: output, shape index: {}]
  %s5 = sld [smem:[#allocation0]]
  $region53: #{tpu_custom_call.1} parent=0
    _
  %s7 = ssub.s32 1, %s5
  %s8 = scalar_select 0, %s7, %s5
  $region1: #{tpu_custom_call.1} parent=0
    #allocation2 [shape = 'u8[65536]{0}', space=vmem, size = 0x10000, scoped, tag = 'input window, operand 2, single buffered']
    #allocation3 [shape = 's32[2]{0}', space=sflag, size = 0x8, scoped, tag = 'scoped memory for tpu_custom_call.1']
    #allocation4 [shape = 's32[2]{0}', space=sflag, size = 0x8, scoped, tag = 'scoped memory for tpu_custom_call.1']
    #allocation5 [shape = 'u8[8192]{0}', space=vmem, size = 0x2000, scoped, tag = 'output window, operand 0']
    %9 = vsyncpa [#allocation3], 0
    %10 = vsyncpa [#allocation4], 0
    %s11 = scalar_lea.sflag [#allocation4], 1
    %12 = vsyncpa %s11, 0
    loop: start=0, step=1, limit=4
    $region2: #{tpu_custom_call.1} parent=1 // loop_pre_header
      _
    $region3: #{tpu_custom_call.1} parent=1 // loop_header
      %s14 = sphi 0, %s18
      %p15 = scmp.ge.s32.totalorder %s14, 4
      %s24 = sphi 0, %s26
      %s27 = sphi 0, %s24
      %s28 = sphi 0, %s27
      %s44 = sphi 0, %s28
      %s50 = sphi 0, %s52
      %s53 = sphi 0, %s50
      %s54 = sphi 0, %s53
      %s70 = sphi 0, %s54
      %s74 = sphi 0, %s74
      %s76 = sphi 0, %s74
      %s77 = sphi 0, %s76
      %s91 = sphi 0, %s77
      %s95 = sphi 0, %s95
      %s97 = sphi 0, %s95
      %s98 = sphi 0, %s97
      %s112 = sphi 0, %s98
      %s118 = sphi 0, %s120
      %s121 = sphi 0, %s118
      %s122 = sphi 0, %s121
      %s138 = sphi 0, %s122
    $region4: #{tpu_custom_call.1} parent=1 // loop_header_branch
      %17 = sbr.rel (%p15) target = $region8
    $region5: #{tpu_custom_call.1} parent=1 // loop_body
      %s19 = ssub.s32 %s14, 1
      %s20 = ssub.s32 %s14, 2
      %s21 = sadd.s32 %s14, 1
      %s22 = ssub.s32 %s14, %s21
      %p23 = scmp.eq.s32.totalorder %s22, 0
      %s25 = sadd.s32 %s24, 1
      %s26 = scalar_select %p23, %s24, %s25
      %p29 = pneg %p23
      %p30 = scmp.eq.s32.totalorder %s14, 1
      %p31 = por %p29, %p30
      %p32 = scmp.ne.s32.totalorder %s24, %s27
      %p33 = scmp.eq.s32.totalorder %s14, 0
      %p34 = por %p32, %p33
      %p35 = scmp.ne.s32.totalorder %s24, %s27
      %p36 = scmp.eq.s32.totalorder %s19, 1
      %p37 = por %p35, %p36
      %p38 = scmp.ne.s32.totalorder %s27, %s28
      %p39 = scmp.eq.s32.totalorder %s19, 0
      %p40 = por %p38, %p39
      %p41 = scmp.ne.s32.totalorder %s27, %s28
      %p42 = scmp.eq.s32.totalorder %s20, 1
      %p43 = por %p41, %p42
      %p45 = scmp.ne.s32.totalorder %s28, %s44
      %p46 = scmp.eq.s32.totalorder %s20, 0
      %p47 = por %p45, %p46
      %s48 = ssub.s32 %s14, %s21
      %p49 = scmp.eq.s32.totalorder %s48, 0
      %s51 = sadd.s32 %s50, 1
      %s52 = scalar_select %p49, %s50, %s51
      %p55 = pneg %p49
      %p56 = scmp.eq.s32.totalorder %s14, 1
      %p57 = por %p55, %p56
      %p58 = scmp.ne.s32.totalorder %s50, %s53
      %p59 = scmp.eq.s32.totalorder %s14, 0
      %p60 = por %p58, %p59
      %p61 = scmp.ne.s32.totalorder %s50, %s53
      %p62 = scmp.eq.s32.totalorder %s19, 1
      %p63 = por %p61, %p62
      %p64 = scmp.ne.s32.totalorder %s53, %s54
      %p65 = scmp.eq.s32.totalorder %s19, 0
      %p66 = por %p64, %p65
      %p67 = scmp.ne.s32.totalorder %s53, %s54
      %p68 = scmp.eq.s32.totalorder %s20, 1
      %p69 = por %p67, %p68
      %p71 = scmp.ne.s32.totalorder %s54, %s70
      %p72 = scmp.eq.s32.totalorder %s20, 0
      %p73 = por %p71, %p72
      %s75 = sadd.s32 %s74, 1
      %p78 = scmp.eq.s32.totalorder %s14, 1
      %p79 = scmp.ne.s32.totalorder %s74, %s76
      %p80 = scmp.eq.s32.totalorder %s14, 0
      %p81 = por %p79, %p80
      %p82 = scmp.ne.s32.totalorder %s74, %s76
      %p83 = scmp.eq.s32.totalorder %s19, 1
      %p84 = por %p82, %p83
      %p85 = scmp.ne.s32.totalorder %s76, %s77
      %p86 = scmp.eq.s32.totalorder %s19, 0
      %p87 = por %p85, %p86
      %p88 = scmp.ne.s32.totalorder %s76, %s77
      %p89 = scmp.eq.s32.totalorder %s20, 1
      %p90 = por %p88, %p89
      %p92 = scmp.ne.s32.totalorder %s77, %s91
      %p93 = scmp.eq.s32.totalorder %s20, 0
      %p94 = por %p92, %p93
      %s96 = sadd.s32 %s95, 1
      %p99 = scmp.eq.s32.totalorder %s14, 1
      %p100 = scmp.ne.s32.totalorder %s95, %s97
      %p101 = scmp.eq.s32.totalorder %s14, 0
      %p102 = por %p100, %p101
      %p103 = scmp.ne.s32.totalorder %s95, %s97
      %p104 = scmp.eq.s32.totalorder %s19, 1
      %p105 = por %p103, %p104
      %p106 = scmp.ne.s32.totalorder %s97, %s98
      %p107 = scmp.eq.s32.totalorder %s19, 0
      %p108 = por %p106, %p107
      %p109 = scmp.ne.s32.totalorder %s97, %s98
      %p110 = scmp.eq.s32.totalorder %s20, 1
      %p111 = por %p109, %p110
      %p113 = scmp.ne.s32.totalorder %s98, %s112
      %p114 = scmp.eq.s32.totalorder %s20, 0
      %p115 = por %p113, %p114
      %s116 = ssub.s32 %s14, %s21
      %p117 = scmp.eq.s32.totalorder %s116, 0
      %s119 = sadd.s32 %s118, 1
      %s120 = scalar_select %p117, %s118, %s119
      %p123 = pneg %p117
      %p124 = scmp.eq.s32.totalorder %s14, 1
      %p125 = por %p123, %p124
      %p126 = scmp.ne.s32.totalorder %s118, %s121
      %p127 = scmp.eq.s32.totalorder %s14, 0
      %p128 = por %p126, %p127
      %p129 = scmp.ne.s32.totalorder %s118, %s121
      %p130 = scmp.eq.s32.totalorder %s19, 1
      %p131 = por %p129, %p130
      %p132 = scmp.ne.s32.totalorder %s121, %s122
      %p133 = scmp.eq.s32.totalorder %s19, 0
      %p134 = por %p132, %p133
      %p135 = scmp.ne.s32.totalorder %s121, %s122
      %p136 = scmp.eq.s32.totalorder %s20, 1
      %p137 = por %p135, %p136
      %p139 = scmp.ne.s32.totalorder %s122, %s138
      %p140 = scmp.eq.s32.totalorder %s20, 0
      %p141 = por %p139, %p140
      %p142 = scmp.le.s32.totalorder 1, %s14
      %p143 = scmp.lt.s32.totalorder %s14, 3
      %p144 = pnand %p142, %p143
      %p145 = pneg %p144
      // Predicated region
      $region9: #{tpu_custom_call.1} parent=5 // pred_check
        _
      $region10: #{tpu_custom_call.1} parent=5 // pred_check_branch
        %147 = sbr.rel (%p144) target = $region12
      $region11: #{tpu_custom_call.1} parent=5 // pred_region
        %s148 = ssub.s32 %s14, 1
        // Predicated region
        $region13: #{tpu_custom_call.1} parent=11 // pred_check
          %p149 = pneg %p87
        $region14: #{tpu_custom_call.1} parent=11 // pred_check_branch
          %151 = sbr.rel (%p149) target = $region16
        $region15: #{tpu_custom_call.1} parent=11 // pred_region
          %s153 = ssub.s32 2048, 2048
          %154 = vsyncadd [#allocation3], %s153
          %s155 = sshll.u32 [#allocation2], 4
          %s156 = int_to_ptr.vmem [resolvable:$true] %s155
          %161 = dma.hbm_to_vmem [thread:$0]  %s2, 2048, %s156, [#allocation3], 128, 128, 8
        $region16: #{tpu_custom_call.1} parent=11 // pred_fallthru
          _
        // Predicated region
        $region17: #{tpu_custom_call.1} parent=11 // pred_check
          %p162 = pneg %p108
        $region18: #{tpu_custom_call.1} parent=11 // pred_check_branch
          %164 = sbr.rel (%p162) target = $region20
        $region19: #{tpu_custom_call.1} parent=11 // pred_region
          _
        $region20: #{tpu_custom_call.1} parent=11 // pred_fallthru
          _
      $region12: #{tpu_custom_call.1} parent=5 // pred_fallthru
        _
      %p165 = scmp.lt.s32.totalorder %s14, 2
      // Predicated region
      $region21: #{tpu_custom_call.1} parent=5 // pred_check
        %p166 = pneg %p165
      $region22: #{tpu_custom_call.1} parent=5 // pred_check_branch
        %168 = sbr.rel (%p166) target = $region24
      $region23: #{tpu_custom_call.1} parent=5 // pred_region
        // Predicated region
        $region25: #{tpu_custom_call.1} parent=23 // pred_check
          %p169 = pneg %p34
        $region26: #{tpu_custom_call.1} parent=23 // pred_check_branch
          %171 = sbr.rel (%p169) target = $region28
        $region27: #{tpu_custom_call.1} parent=23 // pred_region
          %p172 = scmp.lt.s32.totalorder %s14, 1
          %s173 = scalar_select %p172, %s14, 1
          %s174 = smul.addr %s173, 8
          %s175 = scalar_lea.vmem %s0, %s174
        $region28: #{tpu_custom_call.1} parent=23 // pred_fallthru
          _
        // Predicated region
        $region29: #{tpu_custom_call.1} parent=23 // pred_check
          %p176 = pneg %p60
        $region30: #{tpu_custom_call.1} parent=23 // pred_check_branch
          %178 = sbr.rel (%p176) target = $region32
        $region31: #{tpu_custom_call.1} parent=23 // pred_region
          %p179 = scmp.lt.s32.totalorder %s14, 1
          %s180 = scalar_select %p179, %s14, 1
          %s181 = smul.addr %s180, 8
          %s182 = scalar_lea.vmem %s1, %s181
        $region32: #{tpu_custom_call.1} parent=23 // pred_fallthru
          _
      $region24: #{tpu_custom_call.1} parent=5 // pred_fallthru
        _
      %p183 = scmp.le.s32.totalorder 1, %s14
      %p184 = scmp.lt.s32.totalorder %s14, 3
      %p185 = pnand %p183, %p184
      %p186 = pneg %p185
      // Predicated region
      $region33: #{tpu_custom_call.1} parent=5 // pred_check
        _
      $region34: #{tpu_custom_call.1} parent=5 // pred_check_branch
        %188 = sbr.rel (%p185) target = $region36
      $region35: #{tpu_custom_call.1} parent=5 // pred_region
        %s189 = ssub.s32 %s14, 1
        // Predicated region
        $region37: #{tpu_custom_call.1} parent=35 // pred_check
          %p190 = pneg %p87
        $region38: #{tpu_custom_call.1} parent=35 // pred_check_branch
          %192 = sbr.rel (%p190) target = $region40
        $region39: #{tpu_custom_call.1} parent=35 // pred_region
          %193 = dma.done [#allocation3], 2048
        $region40: #{tpu_custom_call.1} parent=35 // pred_fallthru
          _
        %p194 = scmp.lt.s32.totalorder %s19, 1
        %s195 = scalar_select %p194, %s19, 1
        %s196 = smul.addr %s195, 8
        %s197 = scalar_lea.vmem %s0, %s196
        %p198 = pneg %p40
        %p199 = pneg %p37
        %p200 = scmp.lt.s32.totalorder %s19, 1
        %s201 = scalar_select %p200, %s19, 1
        %s202 = smul.addr %s201, 8
        %s203 = scalar_lea.vmem %s1, %s202
        %p204 = pneg %p66
        %p205 = pneg %p63
        %p206 = pneg %p87
        %p207 = pneg %p84
        %p208 = pneg %p108
        %p209 = pneg %p105
        %p210 = pneg %p134
        %p211 = pneg %p131
        %s212 = sand.u32 %s121, 1
        %s213 = scalar_lea.sflag [#allocation4], %s212
        %s214 = sand.u32 %s121, 1
        %s215 = smul.addr %s214, 8
        %s216 = scalar_lea.vmem [#allocation5], %s215
        %p217 = scmp.lt.s32.totalorder %s19, 1
        %s218 = scalar_select %p217, %s19, 1
        %s219 = smul.addr %s218, 8
        %s220 = scalar_lea.vmem %s0, %s219
        %p221 = scmp.lt.s32.totalorder %s19, 1
        %s222 = scalar_select %p221, %s19, 1
        %s223 = smul.addr %s222, 8
        %s224 = scalar_lea.vmem %s1, %s223
        %v225 = vld [vmem:[%s220] sm:$0xff]
        %v226 = vld [vmem:[%s224] sm:$0xff]
        %227 = vadd.xlane.f32.xlu0 %v225
        %v228 = vpop.xlane.xlu0 %227
        %v229 = vmul.f32 %v228, 0.0625
        %v230 = vmul.f32 %v225, %v225
        %231 = vadd.xlane.f32.xlu0 %v230
        %v232 = vpop.xlane.xlu0 %231
        %v233 = vmul.f32 %v232, 0.0625
        %v234 = vmul.f32 %v229, %v229
        %v235 = vsub.f32 %v233, %v234
        %v236 = vmax.f32 %v235, 0.0
        %v237 = vadd.f32 %v236, 1e-05
        %v238 = vrsqrt.pop %v237
        %v239 = vmul.f32 %v237, %v238
        %vm240 = vcmp.eq.f32.partialorder %v237, inf
        %v241 = vsel %vm240, %v237, %v239
        %vm242 = vcmp.eq.f32.partialorder %v237, 0.0
        %v243 = vand.u32 %v237, 2147483648
        %v244 = vsel %vm242, %v243, %v241
        %v245 = vmul.f32 %v244, %v226
        %247 = vrot.lane.b32.xlu0 %v226, 127
        %v248 = vpop.permute.xlu0 %247
        %v250 = vmul.f32 %v245, %v248
        %v251 = vld [vmem:[#allocation2] sm:$0xff]
        %v252 = vld [vmem:[#allocation2 + $0x8] sm:$0xff]
        %v253 = vld [vmem:[#allocation2 + $0x10] sm:$0xff]
        %v254 = vld [vmem:[#allocation2 + $0x18] sm:$0xff]
        %v255 = vld [vmem:[#allocation2 + $0x20] sm:$0xff]
        %v256 = vld [vmem:[#allocation2 + $0x28] sm:$0xff]
        %v257 = vld [vmem:[#allocation2 + $0x30] sm:$0xff]
        %v258 = vld [vmem:[#allocation2 + $0x38] sm:$0xff]
        %v259 = vld [vmem:[#allocation2 + $0x40] sm:$0xff]
        %v260 = vld [vmem:[#allocation2 + $0x48] sm:$0xff]
        %v261 = vld [vmem:[#allocation2 + $0x50] sm:$0xff]
        %v262 = vld [vmem:[#allocation2 + $0x58] sm:$0xff]
        %v263 = vld [vmem:[#allocation2 + $0x60] sm:$0xff]
        %v264 = vld [vmem:[#allocation2 + $0x68] sm:$0xff]
        %v265 = vld [vmem:[#allocation2 + $0x70] sm:$0xff]
        %v266 = vld [vmem:[#allocation2 + $0x78] sm:$0xff]
        %267 = vmatprep.subr.mxu0 0.0
        %268 = vmatpush1.msra.mxu0 %v266
        %269 = vmatprep.subr.mxu0 0.0
        %270 = vmatpush1.msra.mxu0 %v265
        %271 = vmatprep.subr.mxu0 0.0
        %272 = vmatpush1.msra.mxu0 %v264
        %273 = vmatprep.subr.mxu0 0.0
        %274 = vmatpush1.msra.mxu0 %v263
        %275 = vmatprep.subr.mxu0 0.0
        %276 = vmatpush1.msra.mxu0 %v262
        %277 = vmatprep.subr.mxu0 0.0
        %278 = vmatpush1.msra.mxu0 %v261
        %279 = vmatprep.subr.mxu0 0.0
        %280 = vmatpush1.msra.mxu0 %v260
        %281 = vmatprep.subr.mxu0 0.0
        %282 = vmatpush1.msra.mxu0 %v259
        %283 = vmatprep.subr.mxu0 0.0
        %284 = vmatpush1.msra.mxu0 %v258
        %285 = vmatprep.subr.mxu0 0.0
        %286 = vmatpush1.msra.mxu0 %v257
        %287 = vmatprep.subr.mxu0 0.0
        %288 = vmatpush1.msra.mxu0 %v256
        %289 = vmatprep.subr.mxu0 0.0
        %290 = vmatpush1.msra.mxu0 %v255
        %291 = vmatprep.subr.mxu0 0.0
        %292 = vmatpush1.msra.mxu0 %v254
        %293 = vmatprep.subr.mxu0 0.0
        %294 = vmatpush1.msra.mxu0 %v253
        %295 = vmatprep.subr.mxu0 0.0
        %296 = vmatpush1.msra.mxu0 %v252
        %297 = vmatprep.subr.mxu0 0.0
        %298 = vmatpush1.msra.mxu0 %v251
        %299 = vmatprep.subr.mxu0 0.0
        %300 = vmatpush2.msra.mxu0 0.0
        %301 = vmatprep.subr.mxu0 0.0
        %302 = vmatpush2.msra.mxu0 0.0
        %303 = vmatprep.subr.mxu0 0.0
        %304 = vmatpush2.msra.mxu0 0.0
        %305 = vmatprep.subr.mxu0 0.0
        %306 = vmatpush2.msra.mxu0 0.0
        %307 = vmatprep.subr.mxu0 0.0
        %308 = vmatpush2.msra.mxu0 0.0
        %309 = vmatprep.subr.mxu0 0.0
        %310 = vmatpush2.msra.mxu0 0.0
        %311 = vmatprep.subr.mxu0 0.0
        %312 = vmatpush2.msra.mxu0 0.0
        %313 = vmatprep.subr.mxu0 0.0
        %314 = vmatpush2.msra.mxu0 0.0
        %315 = vmatprep.subr.mxu0 0.0
        %316 = vmatpush2.msra.mxu0 0.0
        %317 = vmatprep.subr.mxu0 0.0
        %318 = vmatpush2.msra.mxu0 0.0
        %319 = vmatprep.subr.mxu0 0.0
        %320 = vmatpush2.msra.mxu0 0.0
        %321 = vmatprep.subr.mxu0 0.0
        %322 = vmatpush2.msra.mxu0 0.0
        %323 = vmatprep.subr.mxu0 0.0
        %324 = vmatpush2.msra.mxu0 0.0
        %325 = vmatprep.subr.mxu0 0.0
        %326 = vmatpush2.msra.mxu0 0.0
        %327 = vmatprep.subr.mxu0 0.0
        %328 = vmatpush2.msra.mxu0 0.0
        %329 = vmatprep.subr.mxu0 0.0
        %330 = vmatpush2.msra.mxu0 0.0
        %331 = vmatprep.mubr.f32.mxu0 0.0
        %332 = vmatmul.mubr.f32.gmra.mxu0 %v225
        %v333 = vpop.f32.mrf.mxu0
        %v334 = vadd.f32 0.0, %v333
        %v335 = vpop.f32.mrf.mxu0
        %336 = vdwg.mxu0
        %v337 = vld [vmem:[%s3] sm:$0x1]
        %v338 = vld [vmem:[%s3 + $0x1] sm:$0x1]
        %339 = vset.pattern.permute.xlu0 0
        %340 = vperm.xlu0 %339, %v226
        %v341 = vpop.permute.xlu0 %340
        %v343 = vmul.f32 %v341, %v334
        %v344 = vmul.f32 %v226, %v229
        %346 = vrot.lane.b32.xlu0 %v344, 1
        %v347 = vpop.permute.xlu0 %346
        %v349 = vsub.f32 %v250, %v347
        %351 = vset.pattern.permute.xlu0 1
        %352 = vperm.xlu0 %351, %v349
        %v353 = vpop.permute.xlu0 %352
        %v355 = vlaneseq
        %v356 = vshrl.u32 %v355, 7
        %v357 = vsub.s32 0, %v356
        %v358 = vrot.slane %v337, %v357
        %v359 = vmul.f32 %v353, %v358
        %v360 = vadd.f32 %v343, %v359
        %362 = vset.pattern.permute.xlu0 1
        %363 = vperm.xlu0 %362, %v245
        %v364 = vpop.permute.xlu0 %363
        %v366 = vlaneseq
        %v367 = vshrl.u32 %v366, 7
        %v368 = vsub.s32 0, %v367
        %v369 = vrot.slane %v338, %v368
        %v370 = vmul.f32 %v364, %v369
        %v371 = vadd.f32 %v360, %v370
        %v372 = vsub.f32 %v229, %v250
        %374 = vset.pattern.permute.xlu0 1
        %375 = vperm.xlu0 %374, %v372
        %v376 = vpop.permute.xlu0 %375
        %v378 = vadd.f32 %v371, %v376
        %379 = vst [vmem:[%s216] sm:$0xff] %v378
        %s380 = sand.u32 %s121, 1
        %s381 = scalar_lea.sflag [#allocation4], %s380
        %s382 = sand.u32 %s121, 1
        %s383 = smul.addr %s382, 8
        %s384 = scalar_lea.vmem [#allocation5], %s383
        // Predicated region
        $region41: #{tpu_custom_call.1} parent=35 // pred_check
          %p385 = pneg %p131
        $region42: #{tpu_custom_call.1} parent=35 // pred_check_branch
          %387 = sbr.rel (%p385) target = $region44
        $region43: #{tpu_custom_call.1} parent=35 // pred_region
          %s389 = ssub.s32 128, 128
          %390 = vsyncadd %s381, %s389
          %s391 = smul.addr %s19, 128
          %s392 = scalar_lea.hbm %s4, %s391
          %s394 = sshll.u32 %s384, 4
          %s395 = int_to_ptr.vmem [resolvable:$true] %s394
          %397 = dma.vmem_to_hbm [thread:$0]  %s395, 128, %s392, %s381
        $region44: #{tpu_custom_call.1} parent=35 // pred_fallthru
          _
      $region36: #{tpu_custom_call.1} parent=5 // pred_fallthru
        _
      %p398 = scmp.le.s32.totalorder 2, %s14
      // Predicated region
      $region45: #{tpu_custom_call.1} parent=5 // pred_check
        %p399 = pneg %p398
      $region46: #{tpu_custom_call.1} parent=5 // pred_check_branch
        %401 = sbr.rel (%p399) target = $region48
      $region47: #{tpu_custom_call.1} parent=5 // pred_region
        %s402 = ssub.s32 %s14, 2
        // Predicated region
        $region49: #{tpu_custom_call.1} parent=47 // pred_check
          %p403 = pneg %p137
        $region50: #{tpu_custom_call.1} parent=47 // pred_check_branch
          %405 = sbr.rel (%p403) target = $region52
        $region51: #{tpu_custom_call.1} parent=47 // pred_region
          %s406 = sand.u32 %s122, 1
          %s407 = scalar_lea.sflag [#allocation4], %s406
          %s408 = sand.u32 %s122, 1
          %s409 = smul.addr %s408, 8
          %s410 = scalar_lea.vmem [#allocation5], %s409
          %411 = dma.done %s407, 128
        $region52: #{tpu_custom_call.1} parent=47 // pred_fallthru
          _
      $region48: #{tpu_custom_call.1} parent=5 // pred_fallthru
        _
    $region6: #{tpu_custom_call.1} parent=1 // loop_footer
      %s18 = sadd.s32 1, %s14
    $region7: #{tpu_custom_call.1} parent=1 // loop_footer_branch
      %13 = sbr.rel target = $region3
    $region8: #{tpu_custom_call.1} parent=1 // loop_exit
      _
    %412 = vsyncpa [#allocation3], 1
    %s413 = scalar_lea.sflag [#allocation3], 1
    %414 = vsyncpa %s413, 1
    %415 = vsyncpa [#allocation4], 1
    %s416 = scalar_lea.sflag [#allocation4], 1
    %417 = vsyncpa %s416, 1

// kernel: tpu_custom_call.1
$region0: #{tpu_custom_call.1}
  #allocation0 [shape = 'u32[]', space=smem, size = 0x4, offset = 0x4, fixed_abs, tag = 'smem constant byte address 0x4 - core index']
  #allocation1 [shape = 'u32[144,128]{1,0:T(1,128)}', space=vmem, size = 0x12000, scoped, tag = 'internal scratch']
  %s0 = inlined_call_operand.vmem [shape: f32[16,128], index: 0, kind: input, shape index: {}]
  %s1 = inlined_call_operand.vmem [shape: f32[16,3], index: 1, kind: input, shape index: {}]
  %s2 = inlined_call_operand.hbm [shape: f32[128,128], index: 2, kind: input, shape index: {}]
  %s3 = inlined_call_operand.vmem [shape: f32[2,128], index: 3, kind: input, shape index: {}]
  %s4 = inlined_call_operand.hbm [shape: f32[16,128], index: 4, kind: output, shape index: {}]
  %s5 = sld [smem:[#allocation0]]
  $region53: #{tpu_custom_call.1} parent=0
    _
  %s7 = ssub.s32 1, %s5
  %s8 = scalar_select 0, %s7, %s5
  $region1: #{tpu_custom_call.1} parent=0
    #allocation2 [shape = 'u8[65536]{0}', space=vmem, size = 0x10000, scoped, tag = 'input window, operand 2, single buffered']
    #allocation3 [shape = 's32[2]{0}', space=sflag, size = 0x8, scoped, tag = 'scoped memory for tpu_custom_call.1']
    #allocation4 [shape = 's32[2]{0}', space=sflag, size = 0x8, scoped, tag = 'scoped memory for tpu_custom_call.1']
    #allocation5 [shape = 'u8[8192]{0}', space=vmem, size = 0x2000, scoped, tag = 'output window, operand 0']
    %9 = vsyncpa [#allocation3], 0
    %10 = vsyncpa [#allocation4], 0
    %s11 = scalar_lea.sflag [#allocation4], 1
    %12 = vsyncpa %s11, 0
    loop: start=0, step=1, limit=4
    $region2: #{tpu_custom_call.1} parent=1 // loop_pre_header
      _
    $region3: #{tpu_custom_call.1} parent=1 // loop_header
      %s14 = sphi 0, %s18
      %p15 = scmp.ge.s32.totalorder %s14, 4
      %s24 = sphi 0, %s26
      %s27 = sphi 0, %s24
      %s28 = sphi 0, %s27
      %s44 = sphi 0, %s28
      %s50 = sphi 0, %s52
      %s53 = sphi 0, %s50
      %s54 = sphi 0, %s53
      %s70 = sphi 0, %s54
      %s74 = sphi 0, %s74
      %s76 = sphi 0, %s74
      %s77 = sphi 0, %s76
      %s91 = sphi 0, %s77
      %s95 = sphi 0, %s95
      %s97 = sphi 0, %s95
      %s98 = sphi 0, %s97
      %s112 = sphi 0, %s98
      %s118 = sphi 0, %s120
      %s121 = sphi 0, %s118
      %s122 = sphi 0, %s121
      %s138 = sphi 0, %s122
    $region4: #{tpu_custom_call.1} parent=1 // loop_header_branch
      %17 = sbr.rel (%p15) target = $region8
    $region5: #{tpu_custom_call.1} parent=1 // loop_body
      %s19 = ssub.s32 %s14, 1
      %s20 = ssub.s32 %s14, 2
      %s21 = sadd.s32 %s14, 1
      %s22 = ssub.s32 %s14, %s21
      %p23 = scmp.eq.s32.totalorder %s22, 0
      %s25 = sadd.s32 %s24, 1
      %s26 = scalar_select %p23, %s24, %s25
      %p29 = pneg %p23
      %p30 = scmp.eq.s32.totalorder %s14, 1
      %p31 = por %p29, %p30
      %p32 = scmp.ne.s32.totalorder %s24, %s27
      %p33 = scmp.eq.s32.totalorder %s14, 0
      %p34 = por %p32, %p33
      %p35 = scmp.ne.s32.totalorder %s24, %s27
      %p36 = scmp.eq.s32.totalorder %s19, 1
      %p37 = por %p35, %p36
      %p38 = scmp.ne.s32.totalorder %s27, %s28
      %p39 = scmp.eq.s32.totalorder %s19, 0
      %p40 = por %p38, %p39
      %p41 = scmp.ne.s32.totalorder %s27, %s28
      %p42 = scmp.eq.s32.totalorder %s20, 1
      %p43 = por %p41, %p42
      %p45 = scmp.ne.s32.totalorder %s28, %s44
      %p46 = scmp.eq.s32.totalorder %s20, 0
      %p47 = por %p45, %p46
      %s48 = ssub.s32 %s14, %s21
      %p49 = scmp.eq.s32.totalorder %s48, 0
      %s51 = sadd.s32 %s50, 1
      %s52 = scalar_select %p49, %s50, %s51
      %p55 = pneg %p49
      %p56 = scmp.eq.s32.totalorder %s14, 1
      %p57 = por %p55, %p56
      %p58 = scmp.ne.s32.totalorder %s50, %s53
      %p59 = scmp.eq.s32.totalorder %s14, 0
      %p60 = por %p58, %p59
      %p61 = scmp.ne.s32.totalorder %s50, %s53
      %p62 = scmp.eq.s32.totalorder %s19, 1
      %p63 = por %p61, %p62
      %p64 = scmp.ne.s32.totalorder %s53, %s54
      %p65 = scmp.eq.s32.totalorder %s19, 0
      %p66 = por %p64, %p65
      %p67 = scmp.ne.s32.totalorder %s53, %s54
      %p68 = scmp.eq.s32.totalorder %s20, 1
      %p69 = por %p67, %p68
      %p71 = scmp.ne.s32.totalorder %s54, %s70
      %p72 = scmp.eq.s32.totalorder %s20, 0
      %p73 = por %p71, %p72
      %s75 = sadd.s32 %s74, 1
      %p78 = scmp.eq.s32.totalorder %s14, 1
      %p79 = scmp.ne.s32.totalorder %s74, %s76
      %p80 = scmp.eq.s32.totalorder %s14, 0
      %p81 = por %p79, %p80
      %p82 = scmp.ne.s32.totalorder %s74, %s76
      %p83 = scmp.eq.s32.totalorder %s19, 1
      %p84 = por %p82, %p83
      %p85 = scmp.ne.s32.totalorder %s76, %s77
      %p86 = scmp.eq.s32.totalorder %s19, 0
      %p87 = por %p85, %p86
      %p88 = scmp.ne.s32.totalorder %s76, %s77
      %p89 = scmp.eq.s32.totalorder %s20, 1
      %p90 = por %p88, %p89
      %p92 = scmp.ne.s32.totalorder %s77, %s91
      %p93 = scmp.eq.s32.totalorder %s20, 0
      %p94 = por %p92, %p93
      %s96 = sadd.s32 %s95, 1
      %p99 = scmp.eq.s32.totalorder %s14, 1
      %p100 = scmp.ne.s32.totalorder %s95, %s97
      %p101 = scmp.eq.s32.totalorder %s14, 0
      %p102 = por %p100, %p101
      %p103 = scmp.ne.s32.totalorder %s95, %s97
      %p104 = scmp.eq.s32.totalorder %s19, 1
      %p105 = por %p103, %p104
      %p106 = scmp.ne.s32.totalorder %s97, %s98
      %p107 = scmp.eq.s32.totalorder %s19, 0
      %p108 = por %p106, %p107
      %p109 = scmp.ne.s32.totalorder %s97, %s98
      %p110 = scmp.eq.s32.totalorder %s20, 1
      %p111 = por %p109, %p110
      %p113 = scmp.ne.s32.totalorder %s98, %s112
      %p114 = scmp.eq.s32.totalorder %s20, 0
      %p115 = por %p113, %p114
      %s116 = ssub.s32 %s14, %s21
      %p117 = scmp.eq.s32.totalorder %s116, 0
      %s119 = sadd.s32 %s118, 1
      %s120 = scalar_select %p117, %s118, %s119
      %p123 = pneg %p117
      %p124 = scmp.eq.s32.totalorder %s14, 1
      %p125 = por %p123, %p124
      %p126 = scmp.ne.s32.totalorder %s118, %s121
      %p127 = scmp.eq.s32.totalorder %s14, 0
      %p128 = por %p126, %p127
      %p129 = scmp.ne.s32.totalorder %s118, %s121
      %p130 = scmp.eq.s32.totalorder %s19, 1
      %p131 = por %p129, %p130
      %p132 = scmp.ne.s32.totalorder %s121, %s122
      %p133 = scmp.eq.s32.totalorder %s19, 0
      %p134 = por %p132, %p133
      %p135 = scmp.ne.s32.totalorder %s121, %s122
      %p136 = scmp.eq.s32.totalorder %s20, 1
      %p137 = por %p135, %p136
      %p139 = scmp.ne.s32.totalorder %s122, %s138
      %p140 = scmp.eq.s32.totalorder %s20, 0
      %p141 = por %p139, %p140
      %p142 = scmp.le.s32.totalorder 1, %s14
      %p143 = scmp.lt.s32.totalorder %s14, 3
      %p144 = pnand %p142, %p143
      %p145 = pneg %p144
      // Predicated region
      $region9: #{tpu_custom_call.1} parent=5 // pred_check
        _
      $region10: #{tpu_custom_call.1} parent=5 // pred_check_branch
        %147 = sbr.rel (%p144) target = $region12
      $region11: #{tpu_custom_call.1} parent=5 // pred_region
        %s148 = ssub.s32 %s14, 1
        // Predicated region
        $region13: #{tpu_custom_call.1} parent=11 // pred_check
          %p149 = pneg %p87
        $region14: #{tpu_custom_call.1} parent=11 // pred_check_branch
          %151 = sbr.rel (%p149) target = $region16
        $region15: #{tpu_custom_call.1} parent=11 // pred_region
          %s153 = ssub.s32 2048, 2048
          %154 = vsyncadd [#allocation3], %s153
          %s155 = sshll.u32 [#allocation2], 4
          %s156 = int_to_ptr.vmem [resolvable:$true] %s155
          %161 = dma.hbm_to_vmem [thread:$0]  %s2, 2048, %s156, [#allocation3], 128, 128, 8
        $region16: #{tpu_custom_call.1} parent=11 // pred_fallthru
          _
        // Predicated region
        $region17: #{tpu_custom_call.1} parent=11 // pred_check
          %p162 = pneg %p108
        $region18: #{tpu_custom_call.1} parent=11 // pred_check_branch
          %164 = sbr.rel (%p162) target = $region20
        $region19: #{tpu_custom_call.1} parent=11 // pred_region
          _
        $region20: #{tpu_custom_call.1} parent=11 // pred_fallthru
          _
      $region12: #{tpu_custom_call.1} parent=5 // pred_fallthru
        _
      %p165 = scmp.lt.s32.totalorder %s14, 2
      // Predicated region
      $region21: #{tpu_custom_call.1} parent=5 // pred_check
        %p166 = pneg %p165
      $region22: #{tpu_custom_call.1} parent=5 // pred_check_branch
        %168 = sbr.rel (%p166) target = $region24
      $region23: #{tpu_custom_call.1} parent=5 // pred_region
        // Predicated region
        $region25: #{tpu_custom_call.1} parent=23 // pred_check
          %p169 = pneg %p34
        $region26: #{tpu_custom_call.1} parent=23 // pred_check_branch
          %171 = sbr.rel (%p169) target = $region28
        $region27: #{tpu_custom_call.1} parent=23 // pred_region
          %p172 = scmp.lt.s32.totalorder %s14, 1
          %s173 = scalar_select %p172, %s14, 1
          %s174 = smul.addr %s173, 8
          %s175 = scalar_lea.vmem %s0, %s174
        $region28: #{tpu_custom_call.1} parent=23 // pred_fallthru
          _
        // Predicated region
        $region29: #{tpu_custom_call.1} parent=23 // pred_check
          %p176 = pneg %p60
        $region30: #{tpu_custom_call.1} parent=23 // pred_check_branch
          %178 = sbr.rel (%p176) target = $region32
        $region31: #{tpu_custom_call.1} parent=23 // pred_region
          %p179 = scmp.lt.s32.totalorder %s14, 1
          %s180 = scalar_select %p179, %s14, 1
          %s181 = smul.addr %s180, 8
          %s182 = scalar_lea.vmem %s1, %s181
        $region32: #{tpu_custom_call.1} parent=23 // pred_fallthru
          _
      $region24: #{tpu_custom_call.1} parent=5 // pred_fallthru
        _
      %p183 = scmp.le.s32.totalorder 1, %s14
      %p184 = scmp.lt.s32.totalorder %s14, 3
      %p185 = pnand %p183, %p184
      %p186 = pneg %p185
      // Predicated region
      $region33: #{tpu_custom_call.1} parent=5 // pred_check
        _
      $region34: #{tpu_custom_call.1} parent=5 // pred_check_branch
        %188 = sbr.rel (%p185) target = $region36
      $region35: #{tpu_custom_call.1} parent=5 // pred_region
        %s189 = ssub.s32 %s14, 1
        // Predicated region
        $region37: #{tpu_custom_call.1} parent=35 // pred_check
          %p190 = pneg %p87
        $region38: #{tpu_custom_call.1} parent=35 // pred_check_branch
          %192 = sbr.rel (%p190) target = $region40
        $region39: #{tpu_custom_call.1} parent=35 // pred_region
          %193 = dma.done [#allocation3], 2048
        $region40: #{tpu_custom_call.1} parent=35 // pred_fallthru
          _
        %p194 = scmp.lt.s32.totalorder %s19, 1
        %s195 = scalar_select %p194, %s19, 1
        %s196 = smul.addr %s195, 8
        %s197 = scalar_lea.vmem %s0, %s196
        %p198 = pneg %p40
        %p199 = pneg %p37
        %p200 = scmp.lt.s32.totalorder %s19, 1
        %s201 = scalar_select %p200, %s19, 1
        %s202 = smul.addr %s201, 8
        %s203 = scalar_lea.vmem %s1, %s202
        %p204 = pneg %p66
        %p205 = pneg %p63
        %p206 = pneg %p87
        %p207 = pneg %p84
        %p208 = pneg %p108
        %p209 = pneg %p105
        %p210 = pneg %p134
        %p211 = pneg %p131
        %s212 = sand.u32 %s121, 1
        %s213 = scalar_lea.sflag [#allocation4], %s212
        %s214 = sand.u32 %s121, 1
        %s215 = smul.addr %s214, 8
        %s216 = scalar_lea.vmem [#allocation5], %s215
        %p217 = scmp.lt.s32.totalorder %s19, 1
        %s218 = scalar_select %p217, %s19, 1
        %s219 = smul.addr %s218, 8
        %s220 = scalar_lea.vmem %s0, %s219
        %p221 = scmp.lt.s32.totalorder %s19, 1
        %s222 = scalar_select %p221, %s19, 1
        %s223 = smul.addr %s222, 8
        %s224 = scalar_lea.vmem %s1, %s223
        %v225 = vld [vmem:[%s220] sm:$0xff]
        %v226 = vld [vmem:[%s224] sm:$0xff]
        %227 = vadd.xlane.f32.xlu0 %v225
        %v228 = vpop.xlane.xlu0 %227
        %v229 = vmul.f32 %v228, 0.0625
        %v230 = vmul.f32 %v225, %v225
        %231 = vadd.xlane.f32.xlu0 %v230
        %v232 = vpop.xlane.xlu0 %231
        %v233 = vmul.f32 %v232, 0.0625
        %v234 = vmul.f32 %v229, %v229
        %v235 = vsub.f32 %v233, %v234
        %v236 = vmax.f32 %v235, 0.0
        %v237 = vadd.f32 %v236, 1e-05
        %v238 = vrsqrt.pop %v237
        %v239 = vmul.f32 %v237, %v238
        %vm240 = vcmp.eq.f32.partialorder %v237, inf
        %v241 = vsel %vm240, %v237, %v239
        %vm242 = vcmp.eq.f32.partialorder %v237, 0.0
        %v243 = vand.u32 %v237, 2147483648
        %v244 = vsel %vm242, %v243, %v241
        %v245 = vmul.f32 %v244, %v226
        %247 = vrot.lane.b32.xlu0 %v226, 127
        %v248 = vpop.permute.xlu0 %247
        %v250 = vmul.f32 %v245, %v248
        %v251 = vld [vmem:[#allocation2] sm:$0xff]
        %v252 = vld [vmem:[#allocation2 + $0x8] sm:$0xff]
        %v253 = vld [vmem:[#allocation2 + $0x10] sm:$0xff]
        %v254 = vld [vmem:[#allocation2 + $0x18] sm:$0xff]
        %v255 = vld [vmem:[#allocation2 + $0x20] sm:$0xff]
        %v256 = vld [vmem:[#allocation2 + $0x28] sm:$0xff]
        %v257 = vld [vmem:[#allocation2 + $0x30] sm:$0xff]
        %v258 = vld [vmem:[#allocation2 + $0x38] sm:$0xff]
        %v259 = vld [vmem:[#allocation2 + $0x40] sm:$0xff]
        %v260 = vld [vmem:[#allocation2 + $0x48] sm:$0xff]
        %v261 = vld [vmem:[#allocation2 + $0x50] sm:$0xff]
        %v262 = vld [vmem:[#allocation2 + $0x58] sm:$0xff]
        %v263 = vld [vmem:[#allocation2 + $0x60] sm:$0xff]
        %v264 = vld [vmem:[#allocation2 + $0x68] sm:$0xff]
        %v265 = vld [vmem:[#allocation2 + $0x70] sm:$0xff]
        %v266 = vld [vmem:[#allocation2 + $0x78] sm:$0xff]
        %267 = vmatprep.subr.mxu0 0.0
        %268 = vmatpush1.msra.mxu0 %v266
        %269 = vmatprep.subr.mxu0 0.0
        %270 = vmatpush1.msra.mxu0 %v265
        %271 = vmatprep.subr.mxu0 0.0
        %272 = vmatpush1.msra.mxu0 %v264
        %273 = vmatprep.subr.mxu0 0.0
        %274 = vmatpush1.msra.mxu0 %v263
        %275 = vmatprep.subr.mxu0 0.0
        %276 = vmatpush1.msra.mxu0 %v262
        %277 = vmatprep.subr.mxu0 0.0
        %278 = vmatpush1.msra.mxu0 %v261
        %279 = vmatprep.subr.mxu0 0.0
        %280 = vmatpush1.msra.mxu0 %v260
        %281 = vmatprep.subr.mxu0 0.0
        %282 = vmatpush1.msra.mxu0 %v259
        %283 = vmatprep.subr.mxu0 0.0
        %284 = vmatpush1.msra.mxu0 %v258
        %285 = vmatprep.subr.mxu0 0.0
        %286 = vmatpush1.msra.mxu0 %v257
        %287 = vmatprep.subr.mxu0 0.0
        %288 = vmatpush1.msra.mxu0 %v256
        %289 = vmatprep.subr.mxu0 0.0
        %290 = vmatpush1.msra.mxu0 %v255
        %291 = vmatprep.subr.mxu0 0.0
        %292 = vmatpush1.msra.mxu0 %v254
        %293 = vmatprep.subr.mxu0 0.0
        %294 = vmatpush1.msra.mxu0 %v253
        %295 = vmatprep.subr.mxu0 0.0
        %296 = vmatpush1.msra.mxu0 %v252
        %297 = vmatprep.subr.mxu0 0.0
        %298 = vmatpush1.msra.mxu0 %v251
        %299 = vmatprep.subr.mxu0 0.0
        %300 = vmatpush2.msra.mxu0 0.0
        %301 = vmatprep.subr.mxu0 0.0
        %302 = vmatpush2.msra.mxu0 0.0
        %303 = vmatprep.subr.mxu0 0.0
        %304 = vmatpush2.msra.mxu0 0.0
        %305 = vmatprep.subr.mxu0 0.0
        %306 = vmatpush2.msra.mxu0 0.0
        %307 = vmatprep.subr.mxu0 0.0
        %308 = vmatpush2.msra.mxu0 0.0
        %309 = vmatprep.subr.mxu0 0.0
        %310 = vmatpush2.msra.mxu0 0.0
        %311 = vmatprep.subr.mxu0 0.0
        %312 = vmatpush2.msra.mxu0 0.0
        %313 = vmatprep.subr.mxu0 0.0
        %314 = vmatpush2.msra.mxu0 0.0
        %315 = vmatprep.subr.mxu0 0.0
        %316 = vmatpush2.msra.mxu0 0.0
        %317 = vmatprep.subr.mxu0 0.0
        %318 = vmatpush2.msra.mxu0 0.0
        %319 = vmatprep.subr.mxu0 0.0
        %320 = vmatpush2.msra.mxu0 0.0
        %321 = vmatprep.subr.mxu0 0.0
        %322 = vmatpush2.msra.mxu0 0.0
        %323 = vmatprep.subr.mxu0 0.0
        %324 = vmatpush2.msra.mxu0 0.0
        %325 = vmatprep.subr.mxu0 0.0
        %326 = vmatpush2.msra.mxu0 0.0
        %327 = vmatprep.subr.mxu0 0.0
        %328 = vmatpush2.msra.mxu0 0.0
        %329 = vmatprep.subr.mxu0 0.0
        %330 = vmatpush2.msra.mxu0 0.0
        %331 = vmatprep.mubr.f32.mxu0 0.0
        %332 = vmatmul.mubr.f32.gmra.mxu0 %v225
        %v333 = vpop.f32.mrf.mxu0
        %v334 = vadd.f32 0.0, %v333
        %v335 = vpop.f32.mrf.mxu0
        %336 = vdwg.mxu0
        %v337 = vld [vmem:[%s3] sm:$0x1]
        %v338 = vld [vmem:[%s3 + $0x1] sm:$0x1]
        %339 = vset.pattern.permute.xlu0 0
        %340 = vperm.xlu0 %339, %v226
        %v341 = vpop.permute.xlu0 %340
        %v343 = vmul.f32 %v341, %v334
        %v344 = vmul.f32 %v226, %v229
        %346 = vrot.lane.b32.xlu0 %v344, 1
        %v347 = vpop.permute.xlu0 %346
        %v349 = vsub.f32 %v250, %v347
        %351 = vset.pattern.permute.xlu0 1
        %352 = vperm.xlu0 %351, %v349
        %v353 = vpop.permute.xlu0 %352
        %v355 = vlaneseq
        %v356 = vshrl.u32 %v355, 7
        %v357 = vsub.s32 0, %v356
        %v358 = vrot.slane %v337, %v357
        %v359 = vmul.f32 %v353, %v358
        %v360 = vadd.f32 %v343, %v359
        %362 = vset.pattern.permute.xlu0 1
        %363 = vperm.xlu0 %362, %v245
        %v364 = vpop.permute.xlu0 %363
        %v366 = vlaneseq
        %v367 = vshrl.u32 %v366, 7
        %v368 = vsub.s32 0, %v367
        %v369 = vrot.slane %v338, %v368
        %v370 = vmul.f32 %v364, %v369
        %v371 = vadd.f32 %v360, %v370
        %v372 = vsub.f32 %v229, %v250
        %374 = vset.pattern.permute.xlu0 1
        %375 = vperm.xlu0 %374, %v372
        %v376 = vpop.permute.xlu0 %375
        %v378 = vadd.f32 %v371, %v376
        %379 = vst [vmem:[%s216] sm:$0xff] %v378
        %s380 = sand.u32 %s121, 1
        %s381 = scalar_lea.sflag [#allocation4], %s380
        %s382 = sand.u32 %s121, 1
        %s383 = smul.addr %s382, 8
        %s384 = scalar_lea.vmem [#allocation5], %s383
        // Predicated region
        $region41: #{tpu_custom_call.1} parent=35 // pred_check
          %p385 = pneg %p131
        $region42: #{tpu_custom_call.1} parent=35 // pred_check_branch
          %387 = sbr.rel (%p385) target = $region44
        $region43: #{tpu_custom_call.1} parent=35 // pred_region
          %s389 = ssub.s32 128, 128
          %390 = vsyncadd %s381, %s389
          %s391 = smul.addr %s19, 128
          %s392 = scalar_lea.hbm %s4, %s391
          %s394 = sshll.u32 %s384, 4
          %s395 = int_to_ptr.vmem [resolvable:$true] %s394
          %397 = dma.vmem_to_hbm [thread:$0]  %s395, 128, %s392, %s381
        $region44: #{tpu_custom_call.1} parent=35 // pred_fallthru
          _
      $region36: #{tpu_custom_call.1} parent=5 // pred_fallthru
        _
      %p398 = scmp.le.s32.totalorder 2, %s14
      // Predicated region
      $region45: #{tpu_custom_call.1} parent=5 // pred_check
        %p399 = pneg %p398
      $region46: #{tpu_custom_call.1} parent=5 // pred_check_branch
        %401 = sbr.rel (%p399) target = $region48
      $region47: #{tpu_custom_call.1} parent=5 // pred_region
        %s402 = ssub.s32 %s14, 2
        // Predicated region
        $region49: #{tpu_custom_call.1} parent=47 // pred_check
          %p403 = pneg %p137
        $region50: #{tpu_custom_call.1} parent=47 // pred_check_branch
          %405 = sbr.rel (%p403) target = $region52
        $region51: #{tpu_custom_call.1} parent=47 // pred_region
          %s406 = sand.u32 %s122, 1
          %s407 = scalar_lea.sflag [#allocation4], %s406
          %s408 = sand.u32 %s122, 1
          %s409 = smul.addr %s408, 8
          %s410 = scalar_lea.vmem [#allocation5], %s409
          %411 = dma.done %s407, 128
        $region52: #{tpu_custom_call.1} parent=47 // pred_fallthru
          _
      $region48: #{tpu_custom_call.1} parent=5 // pred_fallthru
        _
    $region6: #{tpu_custom_call.1} parent=1 // loop_footer
      %s18 = sadd.s32 1, %s14
    $region7: #{tpu_custom_call.1} parent=1 // loop_footer_branch
      %13 = sbr.rel target = $region3
    $region8: #{tpu_custom_call.1} parent=1 // loop_exit
      _
    %412 = vsyncpa [#allocation3], 1
    %s413 = scalar_lea.sflag [#allocation3], 1
    %414 = vsyncpa %s413, 1
    %415 = vsyncpa [#allocation4], 1
    %s416 = scalar_lea.sflag [#allocation4], 1
    %417 = vsyncpa %s416, 1

</llo_original>
